<compile_context>
chip_gen: v7x
topology: tpu7x:2x2x1
jax: 0.10.0
libtpu: 0.0.40
codegen_flags: <defaults>
</compile_context>

<pallas_src>
import functools

import jax
import jax.numpy as jnp
from jax.experimental import pallas as pl
from jax.experimental.pallas import tpu as pltpu

_LANE = 128


# --------------------------------------------------------------------------
# Kernel
# --------------------------------------------------------------------------
def bnn_mlp_kernel(x_ref, w1_ref, b1_ref, w2_ref, b2_ref, w3_ref, b3_ref,
                   o_ref):
    """One row-tile of the fused 3-layer MLP.

    x_ref : (tile, D)   VMEM, tiled over the grid
    w1_ref: (D, Wp)     VMEM, resident across grid steps
    b1_ref: (1, Wp)     VMEM, resident
    w2_ref: (Wp, Wp)    VMEM, resident
    b2_ref: (1, Wp)     VMEM, resident
    w3_ref: (1, Wp)     VMEM, resident (W3 transposed to a lane row)
    b3_ref: (1, 1)      SMEM scalar
    o_ref : (tile, 1)   VMEM, tiled over the grid
    """
    x = x_ref[...]

    # f32 x f32 matmuls at Mosaic default precision (multi-pass f32 MXU);
    # verified against a Precision.HIGHEST reference at atol=1e-5 in __main__.
    s2 = jnp.dot(x, w1_ref[...], preferred_element_type=jnp.float32)
    a2 = jnp.maximum(s2 + b1_ref[...], 0.0)

    s3 = jnp.dot(a2, w2_ref[...], preferred_element_type=jnp.float32)
    a3 = jnp.maximum(s3 + b2_ref[...], 0.0)

    # Final Linear(width, 1) as VPU multiply + XLU lane reduction.
    out = jnp.sum(a3 * w3_ref[...], axis=-1, keepdims=True)
    o_ref[...] = out + b3_ref[0, 0]


# --------------------------------------------------------------------------
# Wrapper helpers
# --------------------------------------------------------------------------
def _round_up(a, b):
    return (a + b - 1) // b * b


def pad_params(w1, b1, w2, b2, w3, b3, lane=_LANE):
    """Zero-pad the hidden width to a full 128-lane multiple (exact: padded
    units have zero weights + zero bias -> relu(0)=0 -> zero contribution).
    Call once at init; the padded params are reused for every forward."""
    width = w1.shape[1]
    wp = _round_up(max(width, lane), lane)
    p = wp - width
    if p:
        w1 = jnp.pad(w1, ((0, 0), (0, p)))
        b1 = jnp.pad(b1, ((0, 0), (0, p)))
        w2 = jnp.pad(w2, ((0, p), (0, p)))
        b2 = jnp.pad(b2, ((0, 0), (0, p)))
        w3 = jnp.pad(w3, ((0, p), (0, 0)))
    return w1, b1, w2, b2, w3.T, b3          # W3 as a (1, Wp) lane row


def _default_tile_cap():
    """Generation-aware cap on rows per grid step.

    The (tile, 16) f32 X block lane-pads to (tile, 128) in VMEM, and the
    kernel materializes ~3 more (tile, 128) f32 intermediates, so budget is
    roughly tile * 3.5 KiB.  4096 rows (~14 MiB) fits v7x's 64 MiB VMEM with
    full double-buffering; v5e/v6e (128 MiB) can take 8192.
    """
    try:
        vmem = pltpu.get_tpu_info().vmem_capacity_bytes
    except Exception:  # interpret mode / API drift -> conservative default
        vmem = 64 << 20
    return 8192 if vmem >= (96 << 20) else 4096


def _choose_tile(n, cap):
    n8 = _round_up(n, 8)
    if n8 <= 16:                 # tiny batch: single grid step
        return n8
    # >=2 grid steps so v7x's two TensorCores split the batch; cap bounds the
    # double-buffered VMEM footprint.
    return min(cap, _round_up(pl.cdiv(n8, 2), 8))


# --------------------------------------------------------------------------
# Forward
# --------------------------------------------------------------------------
@functools.partial(jax.jit, static_argnames=("tile_cap",))
def bnn_forward_padded(x, w1p, b1p, w2p, b2p, w3_row, b3, *, tile_cap=4096):
    """Batched forward with pre-padded params: X (N, D) -> (N, 1) float32."""
    n, d = x.shape
    wp = w1p.shape[1]

    tile = _choose_tile(n, tile_cap)
    grid = (pl.cdiv(n, tile),)   # ragged last block: OOB reads only feed OOB
                                 # (masked) output rows; no jnp.pad copy of X.

    # ~5 KiB per tile row (lane-padded X block x2 buffers + f32 intermediates
    # + output) + weights/headroom, clamped to stay inside v7x's 64 MiB.
    vmem_bytes = int(min(max(tile * 5 * 1024 + (8 << 20), 16 << 20), 48 << 20))

    const2 = lambda i: (0, 0)    # weights/biases stay VMEM-resident

    return pl.pallas_call(
        bnn_mlp_kernel,
        out_shape=jax.ShapeDtypeStruct((n, 1), jnp.float32),
        grid=grid,
        in_specs=[
            pl.BlockSpec((tile, d), lambda i: (i, 0)),              # X
            pl.BlockSpec((d, wp), const2),                          # W1
            pl.BlockSpec((1, wp), const2),                          # b1
            pl.BlockSpec((wp, wp), const2),                         # W2
            pl.BlockSpec((1, wp), const2),                          # b2
            pl.BlockSpec((1, wp), const2),                          # W3 row
            pl.BlockSpec(memory_space=pltpu.MemorySpace.SMEM),      # b3
        ],
        out_specs=pl.BlockSpec((tile, 1), lambda i: (i, 0)),
        compiler_params=pltpu.CompilerParams(
            dimension_semantics=("parallel",),   # shard rows over v7x's 2 TCs
            vmem_limit_bytes=vmem_bytes,
        ),
    )(x, w1p, b1p, w2p, b2p, w3_row, b3)


def basic_bnn_regress_forward(x, w1, b1, w2, b2, w3, b3, *, tile_cap=None):
    """Convenience wrapper taking unpadded nn.Linear-shaped params."""
    if tile_cap is None:
        tile_cap = _default_tile_cap()
    return bnn_forward_padded(x, *pad_params(w1, b1, w2, b2, w3, b3),
                              tile_cap=tile_cap)


# --------------------------------------------------------------------------
# Reference + test
# --------------------------------------------------------------------------
def init_params(key, D, width):
    """nn.Linear-shaped params (weights stored transposed: (in, out)),
    PyTorch-style U(-1/sqrt(fan_in), 1/sqrt(fan_in)) init."""
    k = jax.random.split(key, 6)

    def u(kk, shape, fan_in):
        bound = 1.0 / jnp.sqrt(fan_in)
        return jax.random.uniform(kk, shape, jnp.float32, -bound, bound)

    w1 = u(k[0], (D, width), D)
    b1 = u(k[1], (1, width), D)
    w2 = u(k[2], (width, width), width)
    b2 = u(k[3], (1, width), width)
    w3 = u(k[4], (width, 1), width)
    b3 = u(k[5], (1, 1), width)
    return w1, b1, w2, b2, w3, b3


def reference_forward(x, w1, b1, w2, b2, w3, b3):
    hi = jax.lax.Precision.HIGHEST
    a2 = jnp.maximum(jnp.dot(x, w1, precision=hi) + b1, 0.0)
    a3 = jnp.maximum(jnp.dot(a2, w2, precision=hi) + b2, 0.0)
    return jnp.dot(a3, w3, precision=hi) + b3


if __name__ == "__main__":
    D, WIDTH = 16, 32

    key = jax.random.PRNGKey(0)
    kx1, kx2, kp = jax.random.split(key, 3)
    params = init_params(kp, D, WIDTH)

    # Pad weights once (hoisted out of the per-call path).
    padded = pad_params(*params)
    tile_cap = _default_tile_cap()

    # Small batch consistent with the module (single-tile grid path).
    x_small = jax.random.normal(kx1, (8, D), jnp.float32)
    out_small = jax.block_until_ready(
        bnn_forward_padded(x_small, *padded, tile_cap=tile_cap))
    ref_small = reference_forward(x_small, *params)
    assert out_small.shape == (8, 1)
    assert jnp.allclose(out_small, ref_small, atol=1e-5, rtol=1e-5)

    # Non-multiple batch: 2-step parallel grid with a ragged (masked) last
    # block and no jnp.pad copy of X.
    x_big = jax.random.normal(kx2, (1000, D), jnp.float32)
    out_big = jax.block_until_ready(
        bnn_forward_padded(x_big, *padded, tile_cap=tile_cap))
    ref_big = reference_forward(x_big, *params)
    assert out_big.shape == (1000, 1)
    assert jnp.allclose(out_big, ref_big, atol=1e-4, rtol=1e-4)

    # Convenience (unpadded-params) wrapper still works.
    out_conv = jax.block_until_ready(
        basic_bnn_regress_forward(x_small, *params))
    assert jnp.allclose(out_conv, ref_small, atol=1e-5, rtol=1e-5)

    print("KERNEL_OK")
</pallas_src>

<mosaic_0001>
module attributes {stable_mosaic.version = 11 : i64} {
  func.func @bnn_mlp_kernel(%arg0: i32, %arg1: memref<8x16xf32, #tpu.memory_space<vmem>>, %arg2: memref<16x128xf32, #tpu.memory_space<vmem>>, %arg3: memref<1x128xf32, #tpu.memory_space<vmem>>, %arg4: memref<128x128xf32, #tpu.memory_space<vmem>>, %arg5: memref<1x128xf32, #tpu.memory_space<vmem>>, %arg6: memref<1x128xf32, #tpu.memory_space<vmem>>, %arg7: memref<1x1xf32, #tpu.memory_space<smem>>, %arg8: memref<8x1xf32, #tpu.memory_space<vmem>>) attributes {dimension_semantics = [#tpu.dimension_semantics<parallel>], iteration_bounds = array<i64: 1>, scalar_prefetch = 0 : i64, scratch_operands = 0 : i64, tpu.core_type = #tpu.core_type<tc>, window_params = [{transform_indices = @transform_0, window_bounds = array<i64: 8, 16>}, {pipeline_mode = #tpu.pipeline_mode<synchronous>, transform_indices = @transform_1, window_bounds = array<i64: 16, 128>}, {pipeline_mode = #tpu.pipeline_mode<synchronous>, transform_indices = @transform_2, window_bounds = array<i64: 1, 128>}, {pipeline_mode = #tpu.pipeline_mode<synchronous>, transform_indices = @transform_3, window_bounds = array<i64: 128, 128>}, {pipeline_mode = #tpu.pipeline_mode<synchronous>, transform_indices = @transform_4, window_bounds = array<i64: 1, 128>}, {pipeline_mode = #tpu.pipeline_mode<synchronous>, transform_indices = @transform_5, window_bounds = array<i64: 1, 128>}, {transform_indices = @transform_6, window_bounds = array<i64: 1, 1>}, {transform_indices = @transform_7, window_bounds = array<i64: 8, 1>}]} {
    %c0 = arith.constant 0 : index
    %c0_0 = arith.constant 0 : index
    %0 = vector.load %arg1[%c0, %c0_0] : memref<8x16xf32, #tpu.memory_space<vmem>>, vector<8x16xf32>
    %c0_1 = arith.constant 0 : index
    %c0_2 = arith.constant 0 : index
    %1 = vector.load %arg2[%c0_1, %c0_2] : memref<16x128xf32, #tpu.memory_space<vmem>>, vector<16x128xf32>
    %cst = arith.constant dense<0.000000e+00> : vector<8x128xf32>
    %2 = tpu.matmul %0, %1, %cst {dimension_numbers = #tpu.dot_dimension_numbers<[1], [0], [0], [1], [0, 0, 1, 1], [], []>} : vector<8x16xf32>, vector<16x128xf32>, vector<8x128xf32> -> vector<8x128xf32>
    %c0_3 = arith.constant 0 : index
    %c0_4 = arith.constant 0 : index
    %3 = vector.load %arg3[%c0_3, %c0_4] : memref<1x128xf32, #tpu.memory_space<vmem>>, vector<1x128xf32>
    %4 = vector.broadcast %3 : vector<1x128xf32> to vector<8x128xf32>
    %5 = arith.addf %2, %4 : vector<8x128xf32>
    %cst_5 = arith.constant 0.000000e+00 : f32
    %6 = vector.broadcast %cst_5 : f32 to vector<8x128xf32>
    %7 = arith.maximumf %5, %6 : vector<8x128xf32>
    %c0_6 = arith.constant 0 : index
    %c0_7 = arith.constant 0 : index
    %8 = vector.load %arg4[%c0_6, %c0_7] : memref<128x128xf32, #tpu.memory_space<vmem>>, vector<128x128xf32>
    %cst_8 = arith.constant dense<0.000000e+00> : vector<8x128xf32>
    %9 = tpu.matmul %7, %8, %cst_8 {dimension_numbers = #tpu.dot_dimension_numbers<[1], [0], [0], [1], [0, 0, 1, 1], [], []>} : vector<8x128xf32>, vector<128x128xf32>, vector<8x128xf32> -> vector<8x128xf32>
    %c0_9 = arith.constant 0 : index
    %c0_10 = arith.constant 0 : index
    %10 = vector.load %arg5[%c0_9, %c0_10] : memref<1x128xf32, #tpu.memory_space<vmem>>, vector<1x128xf32>
    %11 = vector.broadcast %10 : vector<1x128xf32> to vector<8x128xf32>
    %12 = arith.addf %9, %11 : vector<8x128xf32>
    %cst_11 = arith.constant 0.000000e+00 : f32
    %13 = vector.broadcast %cst_11 : f32 to vector<8x128xf32>
    %14 = arith.maximumf %12, %13 : vector<8x128xf32>
    %c0_12 = arith.constant 0 : index
    %c0_13 = arith.constant 0 : index
    %15 = vector.load %arg6[%c0_12, %c0_13] : memref<1x128xf32, #tpu.memory_space<vmem>>, vector<1x128xf32>
    %16 = vector.broadcast %15 : vector<1x128xf32> to vector<8x128xf32>
    %17 = arith.mulf %14, %16 : vector<8x128xf32>
    %cst_14 = arith.constant dense<0.000000e+00> : vector<8xf32>
    %18 = vector.multi_reduction <add>, %17, %cst_14 [1] : vector<8x128xf32> to vector<8xf32>
    %19 = vector.shape_cast %18 : vector<8xf32> to vector<8x1xf32>
    %c0_15 = arith.constant 0 : index
    %c0_16 = arith.constant 0 : index
    %20 = memref.load %arg7[%c0_15, %c0_16] : memref<1x1xf32, #tpu.memory_space<smem>>
    %21 = vector.broadcast %20 : f32 to vector<8x1xf32>
    %22 = arith.addf %19, %21 : vector<8x1xf32>
    %c0_17 = arith.constant 0 : index
    %c0_18 = arith.constant 0 : index
    %23 = vector.load %arg8[%c0_17, %c0_18] : memref<8x1xf32, #tpu.memory_space<vmem>>, vector<8x1xf32>
    tpu.vector_store %arg8[%c0_17, %c0_18], %22 {strides = array<i32>} : memref<8x1xf32, #tpu.memory_space<vmem>>, vector<8x1xf32>,
    return
  }
  func.func @transform_0(%arg0: i32) -> (i32, i32) {
    %c0_i32 = arith.constant 0 : i32
    %c0_i32_0 = arith.constant 0 : i32
    return %arg0, %c0_i32 : i32, i32
  }
  func.func @transform_1(%arg0: i32) -> (i32, i32) {
    %c0_i32 = arith.constant 0 : i32
    %c0_i32_0 = arith.constant 0 : i32
    %c0_i32_1 = arith.constant 0 : i32
    return %c0_i32, %c0_i32_0 : i32, i32
  }
  func.func @transform_2(%arg0: i32) -> (i32, i32) {
    %c0_i32 = arith.constant 0 : i32
    %c0_i32_0 = arith.constant 0 : i32
    %c0_i32_1 = arith.constant 0 : i32
    return %c0_i32, %c0_i32_0 : i32, i32
  }
  func.func @transform_3(%arg0: i32) -> (i32, i32) {
    %c0_i32 = arith.constant 0 : i32
    %c0_i32_0 = arith.constant 0 : i32
    %c0_i32_1 = arith.constant 0 : i32
    return %c0_i32, %c0_i32_0 : i32, i32
  }
  func.func @transform_4(%arg0: i32) -> (i32, i32) {
    %c0_i32 = arith.constant 0 : i32
    %c0_i32_0 = arith.constant 0 : i32
    %c0_i32_1 = arith.constant 0 : i32
    return %c0_i32, %c0_i32_0 : i32, i32
  }
  func.func @transform_5(%arg0: i32) -> (i32, i32) {
    %c0_i32 = arith.constant 0 : i32
    %c0_i32_0 = arith.constant 0 : i32
    %c0_i32_1 = arith.constant 0 : i32
    return %c0_i32, %c0_i32_0 : i32, i32
  }
  func.func @transform_6(%arg0: i32) -> (i32, i32) {
    %c0_i32 = arith.constant 0 : i32
    %c0_i32_0 = arith.constant 0 : i32
    %c0_i32_1 = arith.constant 0 : i32
    return %c0_i32, %c0_i32_0 : i32, i32
  }
  func.func @transform_7(%arg0: i32) -> (i32, i32) {
    %c0_i32 = arith.constant 0 : i32
    %c0_i32_0 = arith.constant 0 : i32
    return %arg0, %c0_i32 : i32, i32
  }
}

</mosaic_0001>

<llo_original>
// kernel: bnn_forward_padded.1
$region0: #{bnn_forward_padded.1}
  #allocation0 [shape = 'u32[]', space=smem, size = 0x4, offset = 0x4, fixed_abs, tag = 'smem constant byte address 0x4 - core index']
  #allocation1 [shape = 'u32[144,128]{1,0:T(1,128)}', space=vmem, size = 0x12000, scoped, tag = 'internal scratch']
  #allocation2 [shape = 'f32[1,1]{1,0:T(1,128)S(6)}', space=smem, size = 0x200, scoped, tag = 'scoped memory for bnn_forward_padded.1']
  %s0 = inlined_call_operand.hbm [shape: f32[8,16], index: 0, kind: input, shape index: {}]
  %s1 = inlined_call_operand.hbm [shape: f32[16,128], index: 1, kind: input, shape index: {}]
  %s2 = inlined_call_operand.vmem [shape: f32[1,128], index: 2, kind: input, shape index: {}]
  %s3 = inlined_call_operand.hbm [shape: f32[128,128], index: 3, kind: input, shape index: {}]
  %s4 = inlined_call_operand.vmem [shape: f32[1,128], index: 4, kind: input, shape index: {}]
  %s5 = inlined_call_operand.vmem [shape: f32[1,128], index: 5, kind: input, shape index: {}]
  %s6 = inlined_call_operand.<no memory space> [shape: f32[1,1], index: 6, kind: input, shape index: {}]
  %s7 = inlined_call_operand.vmem [shape: f32[8,1], index: 7, kind: output, shape index: {}]
  %s8 = sld [smem:[#allocation0]]
  $region50: #{bnn_forward_padded.1} parent=0
    _
  %s10 = ssub.s32 1, %s8
  %s11 = scalar_select 0, %s10, %s8
  %12 = sst [smem:[#allocation2]] %s6
  $region1: #{bnn_forward_padded.1} parent=0
    #allocation3 [shape = 'u8[4096]{0}', space=vmem, size = 0x1000, scoped, tag = 'input window, operand 0, single buffered']
    #allocation4 [shape = 's32[1]{0}', space=sflag, size = 0x4, scoped, tag = 'scoped memory for bnn_forward_padded.1']
    #allocation5 [shape = 'u8[8192]{0}', space=vmem, size = 0x2000, scoped, tag = 'input window, operand 1, single buffered']
    #allocation6 [shape = 's32[1]{0}', space=sflag, size = 0x4, scoped, tag = 'scoped memory for bnn_forward_padded.1']
    #allocation7 [shape = 'u8[65536]{0}', space=vmem, size = 0x10000, scoped, tag = 'input window, operand 3, single buffered']
    %13 = vsyncpa [#allocation4], 0
    %14 = vsyncpa [#allocation6], 0
    // Predicated region
    $region2: #{bnn_forward_padded.1} parent=1 // pred_check
      _
    $region3: #{bnn_forward_padded.1} parent=1 // pred_check_branch
      %16 = sbr.rel (0) target = $region5
    $region4: #{bnn_forward_padded.1} parent=1 // pred_region
      %s18 = ssub.s32 128, 128
      %19 = vsyncadd [#allocation4], %s18
      %s21 = sshll.u32 [#allocation3], 4
      %s22 = int_to_ptr.vmem [resolvable:$true] %s21
      %24 = dma.hbm_to_vmem [thread:$0]  %s0, 128, %s22, [#allocation4]
    $region5: #{bnn_forward_padded.1} parent=1 // pred_fallthru
      _
    // Predicated region
    $region6: #{bnn_forward_padded.1} parent=1 // pred_check
      _
    $region7: #{bnn_forward_padded.1} parent=1 // pred_check_branch
      %26 = sbr.rel (0) target = $region9
    $region8: #{bnn_forward_padded.1} parent=1 // pred_region
      %s28 = ssub.s32 256, 256
      %29 = vsyncadd [#allocation6], %s28
      %s30 = sshll.u32 [#allocation5], 4
      %s31 = int_to_ptr.vmem [resolvable:$true] %s30
      %36 = dma.hbm_to_vmem [thread:$0]  %s1, 256, %s31, [#allocation6], 128, 128, 8
    $region9: #{bnn_forward_padded.1} parent=1 // pred_fallthru
      _
    // Predicated region
    $region10: #{bnn_forward_padded.1} parent=1 // pred_check
      _
    $region11: #{bnn_forward_padded.1} parent=1 // pred_check_branch
      %38 = sbr.rel (0) target = $region13
    $region12: #{bnn_forward_padded.1} parent=1 // pred_region
      _
    $region13: #{bnn_forward_padded.1} parent=1 // pred_fallthru
      _
    // Predicated region
    $region14: #{bnn_forward_padded.1} parent=1 // pred_check
      _
    $region15: #{bnn_forward_padded.1} parent=1 // pred_check_branch
      %40 = sbr.rel (0) target = $region17
    $region16: #{bnn_forward_padded.1} parent=1 // pred_region
      %s42 = ssub.s32 2048, 2048
      %43 = vsyncadd [#allocation6], %s42
      %s44 = sshll.u32 [#allocation7], 4
      %s45 = int_to_ptr.vmem [resolvable:$true] %s44
      %50 = dma.hbm_to_vmem [thread:$0]  %s3, 2048, %s45, [#allocation6], 128, 128, 8
    $region17: #{bnn_forward_padded.1} parent=1 // pred_fallthru
      _
    // Predicated region
    $region18: #{bnn_forward_padded.1} parent=1 // pred_check
      _
    $region19: #{bnn_forward_padded.1} parent=1 // pred_check_branch
      %52 = sbr.rel (0) target = $region21
    $region20: #{bnn_forward_padded.1} parent=1 // pred_region
      _
    $region21: #{bnn_forward_padded.1} parent=1 // pred_fallthru
      _
    // Predicated region
    $region22: #{bnn_forward_padded.1} parent=1 // pred_check
      _
    $region23: #{bnn_forward_padded.1} parent=1 // pred_check_branch
      %54 = sbr.rel (0) target = $region25
    $region24: #{bnn_forward_padded.1} parent=1 // pred_region
      _
    $region25: #{bnn_forward_padded.1} parent=1 // pred_fallthru
      _
    // Predicated region
    $region26: #{bnn_forward_padded.1} parent=1 // pred_check
      _
    $region27: #{bnn_forward_padded.1} parent=1 // pred_check_branch
      %56 = sbr.rel (0) target = $region29
    $region28: #{bnn_forward_padded.1} parent=1 // pred_region
      _
    $region29: #{bnn_forward_padded.1} parent=1 // pred_fallthru
      _
    // Predicated region
    $region30: #{bnn_forward_padded.1} parent=1 // pred_check
      _
    $region31: #{bnn_forward_padded.1} parent=1 // pred_check_branch
      %58 = sbr.rel (0) target = $region33
    $region32: #{bnn_forward_padded.1} parent=1 // pred_region
      %59 = dma.done [#allocation4], 128
    $region33: #{bnn_forward_padded.1} parent=1 // pred_fallthru
      _
    // Predicated region
    $region34: #{bnn_forward_padded.1} parent=1 // pred_check
      _
    $region35: #{bnn_forward_padded.1} parent=1 // pred_check_branch
      %61 = sbr.rel (0) target = $region37
    $region36: #{bnn_forward_padded.1} parent=1 // pred_region
      %62 = dma.done [#allocation6], 256
    $region37: #{bnn_forward_padded.1} parent=1 // pred_fallthru
      _
    // Predicated region
    $region38: #{bnn_forward_padded.1} parent=1 // pred_check
      _
    $region39: #{bnn_forward_padded.1} parent=1 // pred_check_branch
      %64 = sbr.rel (0) target = $region41
    $region40: #{bnn_forward_padded.1} parent=1 // pred_region
      %65 = dma.done [#allocation6], 2048
    $region41: #{bnn_forward_padded.1} parent=1 // pred_fallthru
      _
    %v66 = vld [vmem:[#allocation3] sm:$0xff]
    %v67 = vld [vmem:[#allocation5] sm:$0xff]
    %v68 = vld [vmem:[#allocation5 + $0x8] sm:$0xff]
    %v69 = vld [vmem:[%s2] sm:$0x1]
    %v71 = vlaneseq
    %v72 = vshrl.u32 %v71, 7
    %v73 = vsub.s32 0, %v72
    %v74 = vrot.slane %v69, %v73
    %vm76 = vcmask 130048
    %v78 = vsel %vm76, %v66, 0
    %80 = vmatprep.subr.mxu0 0.0
    %81 = vmatpush1.msra.mxu0 %v67
    %82 = vmatprep.subr.mxu0 0.0
    %83 = vmatpush1.msra.mxu0 %v68
    %84 = vmatprep.subr.mxu0 0.0
    %85 = vmatpush1.msra.mxu0 0.0
    %86 = vmatprep.subr.mxu0 0.0
    %87 = vmatpush1.msra.mxu0 0.0
    %88 = vmatprep.subr.mxu0 0.0
    %89 = vmatpush1.msra.mxu0 0.0
    %90 = vmatprep.subr.mxu0 0.0
    %91 = vmatpush1.msra.mxu0 0.0
    %92 = vmatprep.subr.mxu0 0.0
    %93 = vmatpush1.msra.mxu0 0.0
    %94 = vmatprep.subr.mxu0 0.0
    %95 = vmatpush1.msra.mxu0 0.0
    %96 = vmatprep.subr.mxu0 0.0
    %97 = vmatpush1.msra.mxu0 0.0
    %98 = vmatprep.subr.mxu0 0.0
    %99 = vmatpush1.msra.mxu0 0.0
    %100 = vmatprep.subr.mxu0 0.0
    %101 = vmatpush1.msra.mxu0 0.0
    %102 = vmatprep.subr.mxu0 0.0
    %103 = vmatpush1.msra.mxu0 0.0
    %104 = vmatprep.subr.mxu0 0.0
    %105 = vmatpush1.msra.mxu0 0.0
    %106 = vmatprep.subr.mxu0 0.0
    %107 = vmatpush1.msra.mxu0 0.0
    %108 = vmatprep.subr.mxu0 0.0
    %109 = vmatpush1.msra.mxu0 0.0
    %110 = vmatprep.subr.mxu0 0.0
    %111 = vmatpush1.msra.mxu0 0.0
    %112 = vmatprep.subr.mxu0 0.0
    %113 = vmatpush1.msra.mxu0 0.0
    %114 = vmatprep.subr.mxu0 0.0
    %115 = vmatpush1.msra.mxu0 0.0
    %116 = vmatprep.subr.mxu0 0.0
    %117 = vmatpush1.msra.mxu0 0.0
    %118 = vmatprep.subr.mxu0 0.0
    %119 = vmatpush1.msra.mxu0 0.0
    %120 = vmatprep.subr.mxu0 0.0
    %121 = vmatpush1.msra.mxu0 0.0
    %122 = vmatprep.subr.mxu0 0.0
    %123 = vmatpush1.msra.mxu0 0.0
    %124 = vmatprep.subr.mxu0 0.0
    %125 = vmatpush1.msra.mxu0 0.0
    %126 = vmatprep.subr.mxu0 0.0
    %127 = vmatpush1.msra.mxu0 0.0
    %128 = vmatprep.subr.mxu0 0.0
    %129 = vmatpush1.msra.mxu0 0.0
    %130 = vmatprep.subr.mxu0 0.0
    %131 = vmatpush1.msra.mxu0 0.0
    %132 = vmatprep.subr.mxu0 0.0
    %133 = vmatpush1.msra.mxu0 0.0
    %134 = vmatprep.subr.mxu0 0.0
    %135 = vmatpush1.msra.mxu0 0.0
    %136 = vmatprep.subr.mxu0 0.0
    %137 = vmatpush1.msra.mxu0 0.0
    %138 = vmatprep.subr.mxu0 0.0
    %139 = vmatpush1.msra.mxu0 0.0
    %140 = vmatprep.subr.mxu0 0.0
    %141 = vmatpush1.msra.mxu0 0.0
    %142 = vmatprep.subr.mxu0 0.0
    %143 = vmatpush1.msra.mxu0 0.0
    %144 = vmatprep.mubr.f32.mxu0 0.0
    %145 = vmatmul.mubr.f32.gmra.mrb[0].mxu0 %v78
    %v146 = vpop.f32.mrb[0].mxu0
    %v147 = vadd.f32 %v74, %v146
    %v148 = vpop.f32.mrb[0].mxu0
    %149 = vdwg.mxu0
    %v150 = vmax.f32 %v147, 0.0
    %v151 = vld [vmem:[#allocation7] sm:$0xff]
    %v152 = vld [vmem:[#allocation7 + $0x8] sm:$0xff]
    %v153 = vld [vmem:[#allocation7 + $0x10] sm:$0xff]
    %v154 = vld [vmem:[#allocation7 + $0x18] sm:$0xff]
    %v155 = vld [vmem:[#allocation7 + $0x20] sm:$0xff]
    %v156 = vld [vmem:[#allocation7 + $0x28] sm:$0xff]
    %v157 = vld [vmem:[#allocation7 + $0x30] sm:$0xff]
    %v158 = vld [vmem:[#allocation7 + $0x38] sm:$0xff]
    %v159 = vld [vmem:[#allocation7 + $0x40] sm:$0xff]
    %v160 = vld [vmem:[#allocation7 + $0x48] sm:$0xff]
    %v161 = vld [vmem:[#allocation7 + $0x50] sm:$0xff]
    %v162 = vld [vmem:[#allocation7 + $0x58] sm:$0xff]
    %v163 = vld [vmem:[#allocation7 + $0x60] sm:$0xff]
    %v164 = vld [vmem:[#allocation7 + $0x68] sm:$0xff]
    %v165 = vld [vmem:[#allocation7 + $0x70] sm:$0xff]
    %v166 = vld [vmem:[#allocation7 + $0x78] sm:$0xff]
    %v167 = vld [vmem:[%s4] sm:$0x1]
    %v169 = vlaneseq
    %v170 = vshrl.u32 %v169, 7
    %v171 = vsub.s32 0, %v170
    %v172 = vrot.slane %v167, %v171
    %174 = vmatprep.subr.mxu0 0.0
    %175 = vmatpush1.msra.mxu0 %v151
    %176 = vmatprep.subr.mxu0 0.0
    %177 = vmatpush1.msra.mxu0 %v152
    %178 = vmatprep.subr.mxu0 0.0
    %179 = vmatpush1.msra.mxu0 %v153
    %180 = vmatprep.subr.mxu0 0.0
    %181 = vmatpush1.msra.mxu0 %v154
    %182 = vmatprep.subr.mxu0 0.0
    %183 = vmatpush1.msra.mxu0 %v155
    %184 = vmatprep.subr.mxu0 0.0
    %185 = vmatpush1.msra.mxu0 %v156
    %186 = vmatprep.subr.mxu0 0.0
    %187 = vmatpush1.msra.mxu0 %v157
    %188 = vmatprep.subr.mxu0 0.0
    %189 = vmatpush1.msra.mxu0 %v158
    %190 = vmatprep.subr.mxu0 0.0
    %191 = vmatpush1.msra.mxu0 %v159
    %192 = vmatprep.subr.mxu0 0.0
    %193 = vmatpush1.msra.mxu0 %v160
    %194 = vmatprep.subr.mxu0 0.0
    %195 = vmatpush1.msra.mxu0 %v161
    %196 = vmatprep.subr.mxu0 0.0
    %197 = vmatpush1.msra.mxu0 %v162
    %198 = vmatprep.subr.mxu0 0.0
    %199 = vmatpush1.msra.mxu0 %v163
    %200 = vmatprep.subr.mxu0 0.0
    %201 = vmatpush1.msra.mxu0 %v164
    %202 = vmatprep.subr.mxu0 0.0
    %203 = vmatpush1.msra.mxu0 %v165
    %204 = vmatprep.subr.mxu0 0.0
    %205 = vmatpush1.msra.mxu0 %v166
    %206 = vmatprep.subr.mxu0 0.0
    %207 = vmatpush1.msra.mxu0 0.0
    %208 = vmatprep.subr.mxu0 0.0
    %209 = vmatpush1.msra.mxu0 0.0
    %210 = vmatprep.subr.mxu0 0.0
    %211 = vmatpush1.msra.mxu0 0.0
    %212 = vmatprep.subr.mxu0 0.0
    %213 = vmatpush1.msra.mxu0 0.0
    %214 = vmatprep.subr.mxu0 0.0
    %215 = vmatpush1.msra.mxu0 0.0
    %216 = vmatprep.subr.mxu0 0.0
    %217 = vmatpush1.msra.mxu0 0.0
    %218 = vmatprep.subr.mxu0 0.0
    %219 = vmatpush1.msra.mxu0 0.0
    %220 = vmatprep.subr.mxu0 0.0
    %221 = vmatpush1.msra.mxu0 0.0
    %222 = vmatprep.subr.mxu0 0.0
    %223 = vmatpush1.msra.mxu0 0.0
    %224 = vmatprep.subr.mxu0 0.0
    %225 = vmatpush1.msra.mxu0 0.0
    %226 = vmatprep.subr.mxu0 0.0
    %227 = vmatpush1.msra.mxu0 0.0
    %228 = vmatprep.subr.mxu0 0.0
    %229 = vmatpush1.msra.mxu0 0.0
    %230 = vmatprep.subr.mxu0 0.0
    %231 = vmatpush1.msra.mxu0 0.0
    %232 = vmatprep.subr.mxu0 0.0
    %233 = vmatpush1.msra.mxu0 0.0
    %234 = vmatprep.subr.mxu0 0.0
    %235 = vmatpush1.msra.mxu0 0.0
    %236 = vmatprep.subr.mxu0 0.0
    %237 = vmatpush1.msra.mxu0 0.0
    %238 = vmatprep.mubr.f32.mxu0 0.0
    %239 = vmatmul.mubr.f32.gmra.mrb[0].mxu0 %v150
    %v240 = vpop.f32.mrb[0].mxu0
    %v241 = vadd.f32 %v172, %v240
    %v242 = vpop.f32.mrb[0].mxu0
    %243 = vdwg.mxu0
    %v244 = vmax.f32 %v241, 0.0
    %v245 = vld [vmem:[%s5] sm:$0x1]
    %v247 = vlaneseq
    %v248 = vshrl.u32 %v247, 7
    %v249 = vsub.s32 0, %v248
    %v250 = vrot.slane %v245, %v249
    %v252 = vmul.f32 %v244, %v250
    %253 = vadd.xlane.f32.xlu0 %v252
    %v254 = vpop.xlane.xlu0 %253
    %s255 = sld [smem:[#allocation2]]
    %v256 = vstv %s255
    %v257 = vadd.f32 %v254, %v256
    %vm258 = vcmask 7168
    %259 = vst.msk [vmem:[%s7] sm:$0xff] %vm258, %v257
    // Predicated region
    $region42: #{bnn_forward_padded.1} parent=1 // pred_check
      _
    $region43: #{bnn_forward_padded.1} parent=1 // pred_check_branch
      %261 = sbr.rel (0) target = $region45
    $region44: #{bnn_forward_padded.1} parent=1 // pred_region
      _
    $region45: #{bnn_forward_padded.1} parent=1 // pred_fallthru
      _
    // Predicated region
    $region46: #{bnn_forward_padded.1} parent=1 // pred_check
      _
    $region47: #{bnn_forward_padded.1} parent=1 // pred_check_branch
      %263 = sbr.rel (0) target = $region49
    $region48: #{bnn_forward_padded.1} parent=1 // pred_region
      _
    $region49: #{bnn_forward_padded.1} parent=1 // pred_fallthru
      _
    %264 = vsyncpa [#allocation4], 1
    %265 = vsyncpa [#allocation6], 1

</llo_original>
